<compile_context>
chip_gen: v7x
topology: tpu7x:2x2x1
jax: 0.10.0
libtpu: 0.0.40
codegen_flags: <defaults>
</compile_context>

<pallas_src>
import functools
import math

import jax
import jax.numpy as jnp
from jax.experimental import pallas as pl
from jax.experimental.pallas import tpu as pltpu

ALPHA = 0.2            # LeakyReLU negative slope
NEG_INF = -9e15        # mask value used by the reference module
_VMEM_LIMIT = 60 * 1024 * 1024        # safe on v7x (64 MiB/TC), plenty on v5e/v6e
_TILE_VMEM_BUDGET = 40 * 1024 * 1024  # what the tile picker may consume


def _round_up(x, m):
    return ((x + m - 1) // m) * m


def _pick_tile(total, pref):
    """Largest multiple of 128 dividing `total` (a multiple of 128), <= pref."""
    t = max(128, (min(pref, total) // 128) * 128)
    while total % t:
        t -= 128
    return t


def _pad2(x, rows, cols):
    """Pad a 2-D array with zeros (no-op if already the right shape)."""
    r, c = x.shape
    if r == rows and c == cols:
        return x
    return jnp.pad(x, ((0, rows - r), (0, cols - c)))


# --------------------------------------------------------------------------
# Kernel 1: Wh = h @ W (K-tiled, f32 accumulation) + hoisted Wh·a1 / Wh·a2
# --------------------------------------------------------------------------
def _wh_kernel(h_ref, w_ref, a1_ref, a2_ref, wh_ref, wh1_ref, wh2_ref, acc_ref):
    kk = pl.program_id(1)

    @pl.when(kk == 0)
    def _init():
        acc_ref[...] = jnp.zeros_like(acc_ref)

    acc_ref[...] += jnp.dot(h_ref[...], w_ref[...],
                            preferred_element_type=jnp.float32)

    @pl.when(kk == pl.num_programs(1) - 1)
    def _finalize():
        wh = acc_ref[...]                                     # (tm, fo_pad) f32
        wh_ref[...] = wh.astype(wh_ref.dtype)
        # Attention projections hoisted out of the kv loop (VPU mul + XLU sum).
        wh1_ref[...] = jnp.sum(wh * a1_ref[...], axis=-1, keepdims=True)
        wh2_ref[...] = jnp.sum(wh * a2_ref[...], axis=-1, keepdims=True)


# --------------------------------------------------------------------------
# Kernel 2: masked-softmax attention (online softmax over kv blocks) + ELU
# --------------------------------------------------------------------------
def _attn_kernel(wh1_ref, wh2_ref, whk_ref, adj_ref, out_ref, m_sc, l_sc,
                 *, concat, mxu_dtype, approx_recip):
    kj = pl.program_id(1)

    @pl.when(kj == 0)
    def _init():
        m_sc[...] = jnp.full_like(m_sc, NEG_INF)
        l_sc[...] = jnp.zeros_like(l_sc)
        out_ref[...] = jnp.zeros_like(out_ref)

    # Logits from the precomputed projections: (tm,1) + (1,tk) -> (tm,tk).
    e = wh1_ref[...] + wh2_ref[...]
    e = jnp.maximum(e, ALPHA * e)                    # LeakyReLU (0 < ALPHA < 1)
    e = jnp.where(adj_ref[...] > 0, e, NEG_INF)      # adjacency mask (int8)

    # Online softmax over the kv (column) axis -- f32 throughout.  out_ref is
    # resident across kj (constant output block index) and doubles as the
    # accumulator, so no separate acc scratch is needed.
    m_prev = m_sc[...]
    m_new = jnp.maximum(m_prev, jnp.max(e, axis=-1, keepdims=True))
    corr = jnp.exp(m_prev - m_new)
    p = jnp.exp(e - m_new)
    l_sc[...] = corr * l_sc[...] + jnp.sum(p, axis=-1, keepdims=True)
    out_ref[...] = corr * out_ref[...] + jnp.dot(
        p.astype(mxu_dtype), whk_ref[...], preferred_element_type=jnp.float32)
    m_sc[...] = m_new

    @pl.when(kj == pl.num_programs(1) - 1)
    def _finalize():
        h_prime = out_ref[...] * pl.reciprocal(l_sc[...], approx=approx_recip)
        if concat:  # ELU (expm1 for numerics near 0)
            h_prime = jnp.where(h_prime > 0, h_prime, jnp.expm1(h_prime))
        out_ref[...] = h_prime


# --------------------------------------------------------------------------
# Wrapper
# --------------------------------------------------------------------------
def ag_layer(h, adj, W, a, *, concat=True, mxu_dtype=jnp.bfloat16,
             block_m=512, block_k=1024):
    """Pallas forward of AGLayer.

    h:(N,Fin) f32, adj:(N,N) any numeric (nonzero = edge), W:(Fin,Fout) f32,
    a:(2*Fout,1) f32.  Returns (N, Fout) f32.
    """
    N, f_in = h.shape
    f_out = W.shape[1]

    # Lane-dense padding (multiples of 128) so vregs / stores are full.
    n_pad = _round_up(N, 128)
    fi_pad = _round_up(f_in, 128)
    fo_pad = _round_up(f_out, 128)
    wh_bytes = jnp.dtype(mxu_dtype).itemsize

    # ---- tile selection (VMEM-budget aware, works for v5e/v6e/v7x) -------
    tm = _pick_tile(n_pad, block_m)
    tk = _pick_tile(n_pad, block_k)
    # keep >= 2 row blocks when possible so both v7x TensorCores get work
    if n_pad // tm < 2 and n_pad >= 256:
        tm = _pick_tile(n_pad, n_pad // 2)

    def _attn_vmem(tm_, tk_):
        return (2 * tm_ * tk_                    # adj int8 tile, double-buffered
                + 2 * tk_ * fo_pad * wh_bytes    # Wh kv tile, double-buffered
                + 2 * (tm_ + tk_) * 4            # wh·a1 / wh·a2 projections
                + 2 * tm_ * fo_pad * 4           # resident f32 output block
                + 4 * tm_ * 4)                   # m / l scratch

    while _attn_vmem(tm, tk) > _TILE_VMEM_BUDGET and (tm > 128 or tk > 128):
        if tk >= tm and tk > 128:
            tk = _pick_tile(n_pad, tk - 128)
        elif tm > 128:
            tm = _pick_tile(n_pad, tm - 128)
        else:
            break
    tkk = _pick_tile(fi_pad, 512)                # K tile for Wh = h @ W

    # ---- padded / packed operands (jnp.pad; no extra scatter pass) -------
    h_p = _pad2(h.astype(mxu_dtype), n_pad, fi_pad)
    w_p = _pad2(W.astype(mxu_dtype), fi_pad, fo_pad)
    adj_p = _pad2((adj > 0).astype(jnp.int8), n_pad, n_pad)
    a1 = _pad2(a[:f_out].astype(jnp.float32).reshape(1, f_out), 1, fo_pad)
    a2 = _pad2(a[f_out:].astype(jnp.float32).reshape(1, f_out), 1, fo_pad)

    # ---- Kernel 1: Wh = h @ W, plus hoisted Wh·a1 / Wh·a2 ----------------
    wh, wh_a1, wh_a2 = pl.pallas_call(
        _wh_kernel,
        out_shape=(
            jax.ShapeDtypeStruct((n_pad, fo_pad), mxu_dtype),
            jax.ShapeDtypeStruct((n_pad, 1), jnp.float32),
            jax.ShapeDtypeStruct((n_pad, 1), jnp.float32),
        ),
        grid_spec=pltpu.PrefetchScalarGridSpec(
            num_scalar_prefetch=0,
            grid=(n_pad // tm, fi_pad // tkk),
            in_specs=[
                pl.BlockSpec((tm, tkk), lambda i, k: (i, k)),       # h rows
                pl.BlockSpec((tkk, fo_pad), lambda i, k: (k, 0)),   # W K-slab
                pl.BlockSpec((1, fo_pad), lambda i, k: (0, 0)),     # a1
                pl.BlockSpec((1, fo_pad), lambda i, k: (0, 0)),     # a2
            ],
            out_specs=[
                pl.BlockSpec((tm, fo_pad), lambda i, k: (i, 0)),    # Wh
                pl.BlockSpec((tm, 1), lambda i, k: (i, 0)),         # Wh·a1
                pl.BlockSpec((tm, 1), lambda i, k: (i, 0)),         # Wh·a2
            ],
            scratch_shapes=[pltpu.VMEM((tm, fo_pad), jnp.float32)],
        ),
        compiler_params=pltpu.CompilerParams(
            dimension_semantics=("parallel", "arbitrary"),
            vmem_limit_bytes=_VMEM_LIMIT),
    )(h_p, w_p, a1, a2)

    # (n_pad,1) and (1,n_pad) share the same row-major layout -> free reshape.
    wh_a2_row = wh_a2.reshape(1, n_pad)

    # ---- Kernel 2: masked-softmax attention + att @ Wh (+ ELU) -----------
    kernel = functools.partial(
        _attn_kernel, concat=concat, mxu_dtype=mxu_dtype,
        approx_recip=(mxu_dtype != jnp.float32))
    out = pl.pallas_call(
        kernel,
        out_shape=jax.ShapeDtypeStruct((n_pad, fo_pad), jnp.float32),
        grid_spec=pltpu.PrefetchScalarGridSpec(
            num_scalar_prefetch=0,
            grid=(n_pad // tm, n_pad // tk),         # (rows, kv reduction last)
            in_specs=[
                pl.BlockSpec((tm, 1), lambda qi, kj: (qi, 0)),       # Wh·a1 col
                pl.BlockSpec((1, tk), lambda qi, kj: (0, kj)),       # Wh·a2 row
                pl.BlockSpec((tk, fo_pad), lambda qi, kj: (kj, 0)),  # Wh kv rows
                pl.BlockSpec((tm, tk), lambda qi, kj: (qi, kj)),     # adj tile
            ],
            out_specs=pl.BlockSpec((tm, fo_pad), lambda qi, kj: (qi, 0)),
            scratch_shapes=[
                pltpu.VMEM((tm, 1), jnp.float32),    # running max m
                pltpu.VMEM((tm, 1), jnp.float32),    # running denom l
            ],
        ),
        compiler_params=pltpu.CompilerParams(
            dimension_semantics=("parallel", "arbitrary"),
            vmem_limit_bytes=_VMEM_LIMIT),
    )(wh_a1, wh_a2_row, wh, adj_p)

    return out[:N, :f_out]


# --------------------------------------------------------------------------
# Reference + demo
# --------------------------------------------------------------------------
def _xavier_uniform(key, shape, gain):
    fan_in, fan_out = shape[0], shape[1]
    bound = gain * math.sqrt(6.0 / (fan_in + fan_out))
    return jax.random.uniform(key, shape, minval=-bound, maxval=bound,
                              dtype=jnp.float32)


def _reference(h, adj, W, a, *, concat=True):
    f_out = W.shape[1]
    Wh = h @ W
    e = Wh @ a[:f_out] + (Wh @ a[f_out:]).T
    e = jnp.where(e > 0, e, ALPHA * e)
    att = jnp.where(adj > 0, e, NEG_INF)
    att = jax.nn.softmax(att, axis=1)
    h_prime = att @ Wh
    if concat:
        return jnp.where(h_prime > 0, h_prime, jnp.expm1(h_prime))
    return h_prime


if __name__ == "__main__":
    N, F_IN, F_OUT = 8, 16, 32     # small graph: 8 nodes
    key = jax.random.PRNGKey(0)
    k_h, k_adj, k_w, k_a = jax.random.split(key, 4)

    h = jax.random.normal(k_h, (N, F_IN), dtype=jnp.float32)
    adj = (jax.random.uniform(k_adj, (N, N)) > 0.5).astype(jnp.float32)
    adj = jnp.maximum(adj, jnp.eye(N, dtype=jnp.float32))   # self-loops

    W = _xavier_uniform(k_w, (F_IN, F_OUT), gain=1.414)
    a = _xavier_uniform(k_a, (2 * F_OUT, 1), gain=1.414)

    # bf16 MXU path (default, perf-recommended configuration)
    out_bf16 = ag_layer(h, adj, W, a, concat=True)
    # f32 MXU path (exact reciprocal; tighter numerical check)
    out_f32 = ag_layer(h, adj, W, a, concat=True, mxu_dtype=jnp.float32)
    out_nc = ag_layer(h, adj, W, a, concat=False, mxu_dtype=jnp.float32)
    jax.block_until_ready((out_bf16, out_f32, out_nc))

    ref = _reference(h, adj, W, a, concat=True)
    ref_nc = _reference(h, adj, W, a, concat=False)

    assert out_bf16.shape == (N, F_OUT)
    assert jnp.allclose(out_f32, ref, atol=2e-2, rtol=2e-2), "f32 mismatch"
    assert jnp.allclose(out_nc, ref_nc, atol=2e-2, rtol=2e-2), "no-concat mismatch"
    assert jnp.allclose(out_bf16, ref, atol=1e-1, rtol=1e-1), "bf16 mismatch"
    print("KERNEL_OK")
</pallas_src>

<mosaic_0001>
module attributes {stable_mosaic.version = 11 : i64} {
  func.func @_wh_kernel(%arg0: i32, %arg1: i32, %arg2: memref<128x128xbf16, #tpu.memory_space<vmem>>, %arg3: memref<128x128xbf16, #tpu.memory_space<vmem>>, %arg4: memref<1x128xf32, #tpu.memory_space<vmem>>, %arg5: memref<1x128xf32, #tpu.memory_space<vmem>>, %arg6: memref<128x128xbf16, #tpu.memory_space<vmem>>, %arg7: memref<128x1xf32, #tpu.memory_space<vmem>>, %arg8: memref<128x1xf32, #tpu.memory_space<vmem>>, %arg9: memref<128x128xf32, #tpu.memory_space<vmem>>) attributes {dimension_semantics = [#tpu.dimension_semantics<parallel>, #tpu.dimension_semantics<arbitrary>], iteration_bounds = array<i64: 1, 1>, scalar_prefetch = 0 : i64, scratch_operands = 1 : i64, tpu.core_type = #tpu.core_type<tc>, window_params = [{transform_indices = @transform_0, window_bounds = array<i64: 128, 128>}, {transform_indices = @transform_1, window_bounds = array<i64: 128, 128>}, {pipeline_mode = #tpu.pipeline_mode<synchronous>, transform_indices = @transform_2, window_bounds = array<i64: 1, 128>}, {pipeline_mode = #tpu.pipeline_mode<synchronous>, transform_indices = @transform_3, window_bounds = array<i64: 1, 128>}, {transform_indices = @transform_4, window_bounds = array<i64: 128, 128>}, {transform_indices = @transform_5, window_bounds = array<i64: 128, 1>}, {transform_indices = @transform_6, window_bounds = array<i64: 128, 1>}]} {
    %c0_i32 = arith.constant 0 : i32
    %0 = arith.cmpi eq, %arg1, %c0_i32 : i32
    %1 = arith.extui %0 : i1 to i32
    %c0_i32_0 = arith.constant 0 : i32
    %2 = arith.cmpi ne, %1, %c0_i32_0 : i32
    scf.if %2 {
      %cst_10 = arith.constant 0.000000e+00 : f32
      %12 = vector.broadcast %cst_10 : f32 to vector<128x128xf32>
      %c0_11 = arith.constant 0 : index
      %c0_12 = arith.constant 0 : index
      %13 = vector.load %arg9[%c0_11, %c0_12] : memref<128x128xf32, #tpu.memory_space<vmem>>, vector<128x128xf32>
      tpu.vector_store %arg9[%c0_11, %c0_12], %12 {strides = array<i32>} : memref<128x128xf32, #tpu.memory_space<vmem>>, vector<128x128xf32>,
    } else {
    }
    %c0 = arith.constant 0 : index
    %c0_1 = arith.constant 0 : index
    %3 = vector.load %arg9[%c0, %c0_1] : memref<128x128xf32, #tpu.memory_space<vmem>>, vector<128x128xf32>
    %c0_2 = arith.constant 0 : index
    %c0_3 = arith.constant 0 : index
    %4 = vector.load %arg2[%c0_2, %c0_3] : memref<128x128xbf16, #tpu.memory_space<vmem>>, vector<128x128xbf16>
    %c0_4 = arith.constant 0 : index
    %c0_5 = arith.constant 0 : index
    %5 = vector.load %arg3[%c0_4, %c0_5] : memref<128x128xbf16, #tpu.memory_space<vmem>>, vector<128x128xbf16>
    %cst = arith.constant dense<0.000000e+00> : vector<128x128xf32>
    %6 = tpu.matmul %4, %5, %cst {dimension_numbers = #tpu.dot_dimension_numbers<[1], [0], [0], [1], [0, 0, 1, 1], [], []>} : vector<128x128xbf16>, vector<128x128xbf16>, vector<128x128xf32> -> vector<128x128xf32>
    %7 = arith.addf %3, %6 : vector<128x128xf32>
    %c0_6 = arith.constant 0 : index
    %c0_7 = arith.constant 0 : index
    %8 = vector.load %arg9[%c0_6, %c0_7] : memref<128x128xf32, #tpu.memory_space<vmem>>, vector<128x128xf32>
    tpu.vector_store %arg9[%c0_6, %c0_7], %7 {strides = array<i32>} : memref<128x128xf32, #tpu.memory_space<vmem>>, vector<128x128xf32>,
    %c0_i32_8 = arith.constant 0 : i32
    %9 = arith.cmpi eq, %arg1, %c0_i32_8 : i32
    %10 = arith.extui %9 : i1 to i32
    %c0_i32_9 = arith.constant 0 : i32
    %11 = arith.cmpi ne, %10, %c0_i32_9 : i32
    scf.if %11 {
      %c0_10 = arith.constant 0 : index
      %c0_11 = arith.constant 0 : index
      %12 = vector.load %arg9[%c0_10, %c0_11] : memref<128x128xf32, #tpu.memory_space<vmem>>, vector<128x128xf32>
      %13 = arith.truncf %12 : vector<128x128xf32> to vector<128x128xbf16>
      %c0_12 = arith.constant 0 : index
      %c0_13 = arith.constant 0 : index
      %14 = vector.load %arg6[%c0_12, %c0_13] : memref<128x128xbf16, #tpu.memory_space<vmem>>, vector<128x128xbf16>
      tpu.vector_store %arg6[%c0_12, %c0_13], %13 {strides = array<i32>} : memref<128x128xbf16, #tpu.memory_space<vmem>>, vector<128x128xbf16>,
      %c0_14 = arith.constant 0 : index
      %c0_15 = arith.constant 0 : index
      %15 = vector.load %arg4[%c0_14, %c0_15] : memref<1x128xf32, #tpu.memory_space<vmem>>, vector<1x128xf32>
      %16 = vector.broadcast %15 : vector<1x128xf32> to vector<128x128xf32>
      %17 = arith.mulf %12, %16 : vector<128x128xf32>
      %cst_16 = arith.constant dense<0.000000e+00> : vector<128xf32>
      %18 = vector.multi_reduction <add>, %17, %cst_16 [1] : vector<128x128xf32> to vector<128xf32>
      %19 = vector.shape_cast %18 : vector<128xf32> to vector<128x1xf32>
      %c0_17 = arith.constant 0 : index
      %c0_18 = arith.constant 0 : index
      %20 = vector.load %arg7[%c0_17, %c0_18] : memref<128x1xf32, #tpu.memory_space<vmem>>, vector<128x1xf32>
      tpu.vector_store %arg7[%c0_17, %c0_18], %19 {strides = array<i32>} : memref<128x1xf32, #tpu.memory_space<vmem>>, vector<128x1xf32>,
      %c0_19 = arith.constant 0 : index
      %c0_20 = arith.constant 0 : index
      %21 = vector.load %arg5[%c0_19, %c0_20] : memref<1x128xf32, #tpu.memory_space<vmem>>, vector<1x128xf32>
      %22 = vector.broadcast %21 : vector<1x128xf32> to vector<128x128xf32>
      %23 = arith.mulf %12, %22 : vector<128x128xf32>
      %cst_21 = arith.constant dense<0.000000e+00> : vector<128xf32>
      %24 = vector.multi_reduction <add>, %23, %cst_21 [1] : vector<128x128xf32> to vector<128xf32>
      %25 = vector.shape_cast %24 : vector<128xf32> to vector<128x1xf32>
      %c0_22 = arith.constant 0 : index
      %c0_23 = arith.constant 0 : index
      %26 = vector.load %arg8[%c0_22, %c0_23] : memref<128x1xf32, #tpu.memory_space<vmem>>, vector<128x1xf32>
      tpu.vector_store %arg8[%c0_22, %c0_23], %25 {strides = array<i32>} : memref<128x1xf32, #tpu.memory_space<vmem>>, vector<128x1xf32>,
    } else {
    }
    return
  }
  func.func @transform_0(%arg0: i32, %arg1: i32) -> (i32, i32) {
    %c0_i32 = arith.constant 0 : i32
    return %arg0, %arg1 : i32, i32
  }
  func.func @transform_1(%arg0: i32, %arg1: i32) -> (i32, i32) {
    %c0_i32 = arith.constant 0 : i32
    %c0_i32_0 = arith.constant 0 : i32
    return %arg1, %c0_i32 : i32, i32
  }
  func.func @transform_2(%arg0: i32, %arg1: i32) -> (i32, i32) {
    %c0_i32 = arith.constant 0 : i32
    %c0_i32_0 = arith.constant 0 : i32
    %c0_i32_1 = arith.constant 0 : i32
    return %c0_i32, %c0_i32_0 : i32, i32
  }
  func.func @transform_3(%arg0: i32, %arg1: i32) -> (i32, i32) {
    %c0_i32 = arith.constant 0 : i32
    %c0_i32_0 = arith.constant 0 : i32
    %c0_i32_1 = arith.constant 0 : i32
    return %c0_i32, %c0_i32_0 : i32, i32
  }
  func.func @transform_4(%arg0: i32, %arg1: i32) -> (i32, i32) {
    %c0_i32 = arith.constant 0 : i32
    %c0_i32_0 = arith.constant 0 : i32
    return %arg0, %c0_i32 : i32, i32
  }
  func.func @transform_5(%arg0: i32, %arg1: i32) -> (i32, i32) {
    %c0_i32 = arith.constant 0 : i32
    %c0_i32_0 = arith.constant 0 : i32
    return %arg0, %c0_i32 : i32, i32
  }
  func.func @transform_6(%arg0: i32, %arg1: i32) -> (i32, i32) {
    %c0_i32 = arith.constant 0 : i32
    %c0_i32_0 = arith.constant 0 : i32
    return %arg0, %c0_i32 : i32, i32
  }
}

</mosaic_0001>

<llo_original>
// kernel: tpu_custom_call.1
$region0: #{tpu_custom_call.1}
  #allocation0 [shape = 'u32[]', space=smem, size = 0x4, offset = 0x4, fixed_abs, tag = 'smem constant byte address 0x4 - core index']
  #allocation1 [shape = 'u32[144,128]{1,0:T(1,128)}', space=vmem, size = 0x12000, scoped, tag = 'internal scratch']
  #allocation2 [shape = 'f32[128,128]{1,0:T(8,128)}', space=vmem, size = 0x10000, scoped, tag = 'scratch operand']
  %s0 = inlined_call_operand.hbm [shape: bf16[128,128], index: 0, kind: input, shape index: {}]
  %s1 = inlined_call_operand.hbm [shape: bf16[128,128], index: 1, kind: input, shape index: {}]
  %s2 = inlined_call_operand.vmem [shape: f32[1,128], index: 2, kind: input, shape index: {}]
  %s3 = inlined_call_operand.vmem [shape: f32[1,128], index: 3, kind: input, shape index: {}]
  %s4 = inlined_call_operand.hbm [shape: bf16[128,128], index: 4, kind: output, shape index: {0}]
  %s5 = inlined_call_operand.vmem [shape: f32[128,1], index: 5, kind: output, shape index: {1}]
  %s6 = inlined_call_operand.vmem [shape: f32[128,1], index: 6, kind: output, shape index: {2}]
  %7 = xla_tuple %s4, %s5, %s6
  %s8 = sld [smem:[#allocation0]]
  $region58: #{tpu_custom_call.1} parent=0
    _
  %s10 = ssub.s32 1, %s8
  %s11 = scalar_select 0, %s10, %s8
  $region1: #{tpu_custom_call.1} parent=0
    #allocation3 [shape = 'u8[32768]{0}', space=vmem, size = 0x8000, scoped, tag = 'input window, operand 0, single buffered']
    #allocation4 [shape = 's32[1]{0}', space=sflag, size = 0x4, scoped, tag = 'scoped memory for tpu_custom_call.1']
    #allocation5 [shape = 's32[1]{0}', space=sflag, size = 0x4, scoped, tag = 'scoped memory for tpu_custom_call.1']
    #allocation6 [shape = 'u8[32768]{0}', space=vmem, size = 0x8000, scoped, tag = 'input window, operand 1, single buffered']
    #allocation7 [shape = 's32[1]{0}', space=sflag, size = 0x4, scoped, tag = 'scoped memory for tpu_custom_call.1']
    #allocation8 [shape = 'u8[32768]{0}', space=vmem, size = 0x8000, scoped, tag = 'output window, operand 0, single buffered']
    %12 = vsyncpa [#allocation4], 0
    %13 = vsyncpa [#allocation7], 0
    %14 = vsyncpa [#allocation5], 0
    // Predicated region
    $region2: #{tpu_custom_call.1} parent=1 // pred_check
      _
    $region3: #{tpu_custom_call.1} parent=1 // pred_check_branch
      %16 = sbr.rel (0) target = $region5
    $region4: #{tpu_custom_call.1} parent=1 // pred_region
      %s18 = ssub.s32 1024, 1024
      %19 = vsyncadd [#allocation4], %s18
      %s20 = sshll.u32 [#allocation3], 4
      %s21 = int_to_ptr.vmem [resolvable:$true] %s20
      %26 = dma.hbm_to_vmem [thread:$0]  %s0, 1024, %s21, [#allocation4], 64, 64, 4
    $region5: #{tpu_custom_call.1} parent=1 // pred_fallthru
      _
    // Predicated region
    $region6: #{tpu_custom_call.1} parent=1 // pred_check
      _
    $region7: #{tpu_custom_call.1} parent=1 // pred_check_branch
      %28 = sbr.rel (0) target = $region9
    $region8: #{tpu_custom_call.1} parent=1 // pred_region
      %s30 = ssub.s32 1024, 1024
      %31 = vsyncadd [#allocation7], %s30
      %s32 = sshll.u32 [#allocation6], 4
      %s33 = int_to_ptr.vmem [resolvable:$true] %s32
      %38 = dma.hbm_to_vmem [thread:$0]  %s1, 1024, %s33, [#allocation7], 64, 64, 4
    $region9: #{tpu_custom_call.1} parent=1 // pred_fallthru
      _
    // Predicated region
    $region10: #{tpu_custom_call.1} parent=1 // pred_check
      _
    $region11: #{tpu_custom_call.1} parent=1 // pred_check_branch
      %40 = sbr.rel (0) target = $region13
    $region12: #{tpu_custom_call.1} parent=1 // pred_region
      _
    $region13: #{tpu_custom_call.1} parent=1 // pred_fallthru
      _
    // Predicated region
    $region14: #{tpu_custom_call.1} parent=1 // pred_check
      _
    $region15: #{tpu_custom_call.1} parent=1 // pred_check_branch
      %42 = sbr.rel (0) target = $region17
    $region16: #{tpu_custom_call.1} parent=1 // pred_region
      _
    $region17: #{tpu_custom_call.1} parent=1 // pred_fallthru
      _
    // Predicated region
    $region18: #{tpu_custom_call.1} parent=1 // pred_check
      _
    $region19: #{tpu_custom_call.1} parent=1 // pred_check_branch
      %44 = sbr.rel (0) target = $region21
    $region20: #{tpu_custom_call.1} parent=1 // pred_region
      %45 = dma.done [#allocation4], 1024
    $region21: #{tpu_custom_call.1} parent=1 // pred_fallthru
      _
    // Predicated region
    $region22: #{tpu_custom_call.1} parent=1 // pred_check
      _
    $region23: #{tpu_custom_call.1} parent=1 // pred_check_branch
      %47 = sbr.rel (0) target = $region25
    $region24: #{tpu_custom_call.1} parent=1 // pred_region
      %48 = dma.done [#allocation7], 1024
    $region25: #{tpu_custom_call.1} parent=1 // pred_fallthru
      _
    %p50 = scmp.eq.s32.totalorder 0, 0
    // Predicated region
    $region26: #{tpu_custom_call.1} parent=1 // pred_check
      %p51 = pneg %p50
    $region27: #{tpu_custom_call.1} parent=1 // pred_check_branch
      %53 = sbr.rel (%p51) target = $region29
    $region28: #{tpu_custom_call.1} parent=1 // pred_region
      %54 = vst [vmem:[#allocation2] sm:$0xff] 0.0
      %55 = vst [vmem:[#allocation2 + $0x8] sm:$0xff] 0.0
      %56 = vst [vmem:[#allocation2 + $0x10] sm:$0xff] 0.0
      %57 = vst [vmem:[#allocation2 + $0x18] sm:$0xff] 0.0
      %58 = vst [vmem:[#allocation2 + $0x20] sm:$0xff] 0.0
      %59 = vst [vmem:[#allocation2 + $0x28] sm:$0xff] 0.0
      %60 = vst [vmem:[#allocation2 + $0x30] sm:$0xff] 0.0
      %61 = vst [vmem:[#allocation2 + $0x38] sm:$0xff] 0.0
      %62 = vst [vmem:[#allocation2 + $0x40] sm:$0xff] 0.0
      %63 = vst [vmem:[#allocation2 + $0x48] sm:$0xff] 0.0
      %64 = vst [vmem:[#allocation2 + $0x50] sm:$0xff] 0.0
      %65 = vst [vmem:[#allocation2 + $0x58] sm:$0xff] 0.0
      %66 = vst [vmem:[#allocation2 + $0x60] sm:$0xff] 0.0
      %67 = vst [vmem:[#allocation2 + $0x68] sm:$0xff] 0.0
      %68 = vst [vmem:[#allocation2 + $0x70] sm:$0xff] 0.0
      %69 = vst [vmem:[#allocation2 + $0x78] sm:$0xff] 0.0
    $region29: #{tpu_custom_call.1} parent=1 // pred_fallthru
      _
    %v70 = vld [vmem:[#allocation2] sm:$0xff]
    %v71 = vld [vmem:[#allocation2 + $0x8] sm:$0xff]
    %v72 = vld [vmem:[#allocation2 + $0x10] sm:$0xff]
    %v73 = vld [vmem:[#allocation2 + $0x18] sm:$0xff]
    %v74 = vld [vmem:[#allocation2 + $0x20] sm:$0xff]
    %v75 = vld [vmem:[#allocation2 + $0x28] sm:$0xff]
    %v76 = vld [vmem:[#allocation2 + $0x30] sm:$0xff]
    %v77 = vld [vmem:[#allocation2 + $0x38] sm:$0xff]
    %v78 = vld [vmem:[#allocation2 + $0x40] sm:$0xff]
    %v79 = vld [vmem:[#allocation2 + $0x48] sm:$0xff]
    %v80 = vld [vmem:[#allocation2 + $0x50] sm:$0xff]
    %v81 = vld [vmem:[#allocation2 + $0x58] sm:$0xff]
    %v82 = vld [vmem:[#allocation2 + $0x60] sm:$0xff]
    %v83 = vld [vmem:[#allocation2 + $0x68] sm:$0xff]
    %v84 = vld [vmem:[#allocation2 + $0x70] sm:$0xff]
    %v85 = vld [vmem:[#allocation2 + $0x78] sm:$0xff]
    %v86 = vld [vmem:[#allocation3] sm:$0xf]
    %v87 = vld [vmem:[#allocation3 + $0x4] sm:$0xf]
    %v88 = vld [vmem:[#allocation3 + $0x8] sm:$0xf]
    %v89 = vld [vmem:[#allocation3 + $0xc] sm:$0xf]
    %v90 = vld [vmem:[#allocation3 + $0x10] sm:$0xf]
    %v91 = vld [vmem:[#allocation3 + $0x14] sm:$0xf]
    %v92 = vld [vmem:[#allocation3 + $0x18] sm:$0xf]
    %v93 = vld [vmem:[#allocation3 + $0x1c] sm:$0xf]
    %v94 = vld [vmem:[#allocation3 + $0x20] sm:$0xf]
    %v95 = vld [vmem:[#allocation3 + $0x24] sm:$0xf]
    %v96 = vld [vmem:[#allocation3 + $0x28] sm:$0xf]
    %v97 = vld [vmem:[#allocation3 + $0x2c] sm:$0xf]
    %v98 = vld [vmem:[#allocation3 + $0x30] sm:$0xf]
    %v99 = vld [vmem:[#allocation3 + $0x34] sm:$0xf]
    %v100 = vld [vmem:[#allocation3 + $0x38] sm:$0xf]
    %v101 = vld [vmem:[#allocation3 + $0x3c] sm:$0xf]
    %v102 = vld [vmem:[#allocation6] sm:$0xf]
    %v103 = vld [vmem:[#allocation6 + $0x4] sm:$0xf]
    %v104 = vld [vmem:[#allocation6 + $0x8] sm:$0xf]
    %v105 = vld [vmem:[#allocation6 + $0xc] sm:$0xf]
    %v106 = vld [vmem:[#allocation6 + $0x10] sm:$0xf]
    %v107 = vld [vmem:[#allocation6 + $0x14] sm:$0xf]
    %v108 = vld [vmem:[#allocation6 + $0x18] sm:$0xf]
    %v109 = vld [vmem:[#allocation6 + $0x1c] sm:$0xf]
    %v110 = vld [vmem:[#allocation6 + $0x20] sm:$0xf]
    %v111 = vld [vmem:[#allocation6 + $0x24] sm:$0xf]
    %v112 = vld [vmem:[#allocation6 + $0x28] sm:$0xf]
    %v113 = vld [vmem:[#allocation6 + $0x2c] sm:$0xf]
    %v114 = vld [vmem:[#allocation6 + $0x30] sm:$0xf]
    %v115 = vld [vmem:[#allocation6 + $0x34] sm:$0xf]
    %v116 = vld [vmem:[#allocation6 + $0x38] sm:$0xf]
    %v117 = vld [vmem:[#allocation6 + $0x3c] sm:$0xf]
    %v134 = vunpack.c.l.b16 %v86
    %v135 = vunpack.c.l.b16 %v87
    %v136 = vunpack.c.l.b16 %v88
    %v137 = vunpack.c.l.b16 %v89
    %v138 = vunpack.c.l.b16 %v90
    %v139 = vunpack.c.l.b16 %v91
    %v140 = vunpack.c.l.b16 %v92
    %v141 = vunpack.c.l.b16 %v93
    %v142 = vunpack.c.l.b16 %v94
    %v143 = vunpack.c.l.b16 %v95
    %v144 = vunpack.c.l.b16 %v96
    %v145 = vunpack.c.l.b16 %v97
    %v146 = vunpack.c.l.b16 %v98
    %v147 = vunpack.c.l.b16 %v99
    %v148 = vunpack.c.l.b16 %v100
    %v149 = vunpack.c.l.b16 %v101
    %v150 = vpack.c.b16 %v135, %v134
    %v151 = vpack.c.b16 %v137, %v136
    %v152 = vpack.c.b16 %v139, %v138
    %v153 = vpack.c.b16 %v141, %v140
    %v154 = vpack.c.b16 %v143, %v142
    %v155 = vpack.c.b16 %v145, %v144
    %v156 = vpack.c.b16 %v147, %v146
    %v157 = vpack.c.b16 %v149, %v148
    %v182 = vunpack.c.l.b16 %v102
    %v183 = vunpack.c.l.b16 %v103
    %v184 = vunpack.c.l.b16 %v104
    %v185 = vunpack.c.l.b16 %v105
    %v186 = vunpack.c.l.b16 %v106
    %v187 = vunpack.c.l.b16 %v107
    %v188 = vunpack.c.l.b16 %v108
    %v189 = vunpack.c.l.b16 %v109
    %v190 = vunpack.c.l.b16 %v110
    %v191 = vunpack.c.l.b16 %v111
    %v192 = vunpack.c.l.b16 %v112
    %v193 = vunpack.c.l.b16 %v113
    %v194 = vunpack.c.l.b16 %v114
    %v195 = vunpack.c.l.b16 %v115
    %v196 = vunpack.c.l.b16 %v116
    %v197 = vunpack.c.l.b16 %v117
    %v198 = vpack.c.b16 %v183, %v182
    %v199 = vpack.c.b16 %v185, %v184
    %v200 = vpack.c.b16 %v187, %v186
    %v201 = vpack.c.b16 %v189, %v188
    %v202 = vpack.c.b16 %v191, %v190
    %v203 = vpack.c.b16 %v193, %v192
    %v204 = vpack.c.b16 %v195, %v194
    %v205 = vpack.c.b16 %v197, %v196
    %214 = vmatprep.subr.bf16.mxu0 0
    %215 = vmatpush1.bf16.msra.mxu0 %v198
    %216 = vmatprep.subr.bf16.mxu0 0
    %217 = vmatpush1.bf16.msra.mxu0 %v199
    %218 = vmatprep.subr.bf16.mxu0 0
    %219 = vmatpush1.bf16.msra.mxu0 %v200
    %220 = vmatprep.subr.bf16.mxu0 0
    %221 = vmatpush1.bf16.msra.mxu0 %v201
    %222 = vmatprep.subr.bf16.mxu0 0
    %223 = vmatpush1.bf16.msra.mxu0 %v202
    %224 = vmatprep.subr.bf16.mxu0 0
    %225 = vmatpush1.bf16.msra.mxu0 %v203
    %226 = vmatprep.subr.bf16.mxu0 0
    %227 = vmatpush1.bf16.msra.mxu0 %v204
    %228 = vmatprep.subr.bf16.mxu0 0
    %229 = vmatpush1.bf16.msra.mxu0 %v205
    %230 = vmatprep.subr.bf16.mxu0 0
    %231 = vmatpush1.bf16.msra.mxu0 0
    %232 = vmatprep.subr.bf16.mxu0 0
    %233 = vmatpush1.bf16.msra.mxu0 0
    %234 = vmatprep.subr.bf16.mxu0 0
    %235 = vmatpush1.bf16.msra.mxu0 0
    %236 = vmatprep.subr.bf16.mxu0 0
    %237 = vmatpush1.bf16.msra.mxu0 0
    %238 = vmatprep.subr.bf16.mxu0 0
    %239 = vmatpush1.bf16.msra.mxu0 0
    %240 = vmatprep.subr.bf16.mxu0 0
    %241 = vmatpush1.bf16.msra.mxu0 0
    %242 = vmatprep.subr.bf16.mxu0 0
    %243 = vmatpush1.bf16.msra.mxu0 0
    %244 = vmatprep.subr.bf16.mxu0 0
    %245 = vmatpush1.bf16.msra.mxu0 0
    %246 = vmatprep.mubr.bf16.mxu0 0
    %247 = vmatmul.mubr.bf16.gmra.mrb[0].mxu0 %v150
    %v248 = vpop.f32.mrb[0].mxu0
    %v249 = vadd.f32 0.0, %v248
    %v250 = vpop.f32.mrb[0].mxu0
    %v251 = vpop.f32.mrb[0].mxu0
    %v252 = vadd.f32 0.0, %v251
    %v253 = vpop.f32.mrb[0].mxu0
    %254 = vmatprep.mubr.bf16.mxu0 0
    %255 = vmatmul.mubr.bf16.gmra.mrb[0].mxu0 %v151
    %v256 = vpop.f32.mrb[0].mxu0
    %v257 = vadd.f32 0.0, %v256
    %v258 = vpop.f32.mrb[0].mxu0
    %v259 = vpop.f32.mrb[0].mxu0
    %v260 = vadd.f32 0.0, %v259
    %v261 = vpop.f32.mrb[0].mxu0
    %262 = vmatprep.mubr.bf16.mxu0 0
    %263 = vmatmul.mubr.bf16.gmra.mrb[0].mxu0 %v152
    %v264 = vpop.f32.mrb[0].mxu0
    %v265 = vadd.f32 0.0, %v264
    %v266 = vpop.f32.mrb[0].mxu0
    %v267 = vpop.f32.mrb[0].mxu0
    %v268 = vadd.f32 0.0, %v267
    %v269 = vpop.f32.mrb[0].mxu0
    %270 = vmatprep.mubr.bf16.mxu0 0
    %271 = vmatmul.mubr.bf16.gmra.mrb[0].mxu0 %v153
    %v272 = vpop.f32.mrb[0].mxu0
    %v273 = vadd.f32 0.0, %v272
    %v274 = vpop.f32.mrb[0].mxu0
    %v275 = vpop.f32.mrb[0].mxu0
    %v276 = vadd.f32 0.0, %v275
    %v277 = vpop.f32.mrb[0].mxu0
    %278 = vmatprep.mubr.bf16.mxu0 0
    %279 = vmatmul.mubr.bf16.gmra.mrb[0].mxu0 %v154
    %v280 = vpop.f32.mrb[0].mxu0
    %v281 = vadd.f32 0.0, %v280
    %v282 = vpop.f32.mrb[0].mxu0
    %v283 = vpop.f32.mrb[0].mxu0
    %v284 = vadd.f32 0.0, %v283
    %v285 = vpop.f32.mrb[0].mxu0
    %286 = vmatprep.mubr.bf16.mxu0 0
    %287 = vmatmul.mubr.bf16.gmra.mrb[0].mxu0 %v155
    %v288 = vpop.f32.mrb[0].mxu0
    %v289 = vadd.f32 0.0, %v288
    %v290 = vpop.f32.mrb[0].mxu0
    %v291 = vpop.f32.mrb[0].mxu0
    %v292 = vadd.f32 0.0, %v291
    %v293 = vpop.f32.mrb[0].mxu0
    %294 = vmatprep.mubr.bf16.mxu0 0
    %295 = vmatmul.mubr.bf16.gmra.mrb[0].mxu0 %v156
    %v296 = vpop.f32.mrb[0].mxu0
    %v297 = vadd.f32 0.0, %v296
    %v298 = vpop.f32.mrb[0].mxu0
    %v299 = vpop.f32.mrb[0].mxu0
    %v300 = vadd.f32 0.0, %v299
    %v301 = vpop.f32.mrb[0].mxu0
    %302 = vmatprep.mubr.bf16.mxu0 0
    %303 = vmatmul.mubr.bf16.gmra.mrb[0].mxu0 %v157
    %v304 = vpop.f32.mrb[0].mxu0
    %v305 = vadd.f32 0.0, %v304
    %v306 = vpop.f32.mrb[0].mxu0
    %v307 = vpop.f32.mrb[0].mxu0
    %v308 = vadd.f32 0.0, %v307
    %v309 = vpop.f32.mrb[0].mxu0
    %310 = vdwg.mxu0
    %v311 = vadd.f32 %v70, %v249
    %v312 = vadd.f32 %v71, %v252
    %v313 = vadd.f32 %v72, %v257
    %v314 = vadd.f32 %v73, %v260
    %v315 = vadd.f32 %v74, %v265
    %v316 = vadd.f32 %v75, %v268
    %v317 = vadd.f32 %v76, %v273
    %v318 = vadd.f32 %v77, %v276
    %v319 = vadd.f32 %v78, %v281
    %v320 = vadd.f32 %v79, %v284
    %v321 = vadd.f32 %v80, %v289
    %v322 = vadd.f32 %v81, %v292
    %v323 = vadd.f32 %v82, %v297
    %v324 = vadd.f32 %v83, %v300
    %v325 = vadd.f32 %v84, %v305
    %v326 = vadd.f32 %v85, %v308
    %327 = vst [vmem:[#allocation2] sm:$0xff] %v311
    %328 = vst [vmem:[#allocation2 + $0x8] sm:$0xff] %v312
    %329 = vst [vmem:[#allocation2 + $0x10] sm:$0xff] %v313
    %330 = vst [vmem:[#allocation2 + $0x18] sm:$0xff] %v314
    %331 = vst [vmem:[#allocation2 + $0x20] sm:$0xff] %v315
    %332 = vst [vmem:[#allocation2 + $0x28] sm:$0xff] %v316
    %333 = vst [vmem:[#allocation2 + $0x30] sm:$0xff] %v317
    %334 = vst [vmem:[#allocation2 + $0x38] sm:$0xff] %v318
    %335 = vst [vmem:[#allocation2 + $0x40] sm:$0xff] %v319
    %336 = vst [vmem:[#allocation2 + $0x48] sm:$0xff] %v320
    %337 = vst [vmem:[#allocation2 + $0x50] sm:$0xff] %v321
    %338 = vst [vmem:[#allocation2 + $0x58] sm:$0xff] %v322
    %339 = vst [vmem:[#allocation2 + $0x60] sm:$0xff] %v323
    %340 = vst [vmem:[#allocation2 + $0x68] sm:$0xff] %v324
    %341 = vst [vmem:[#allocation2 + $0x70] sm:$0xff] %v325
    %342 = vst [vmem:[#allocation2 + $0x78] sm:$0xff] %v326
    // Predicated region
    $region30: #{tpu_custom_call.1} parent=1 // pred_check
      %p343 = pneg %p50
    $region31: #{tpu_custom_call.1} parent=1 // pred_check_branch
      %345 = sbr.rel (%p343) target = $region33
    $region32: #{tpu_custom_call.1} parent=1 // pred_region
      %v346 = vld [vmem:[#allocation2] sm:$0xff]
      %v347 = vld [vmem:[#allocation2 + $0x8] sm:$0xff]
      %v348 = vld [vmem:[#allocation2 + $0x10] sm:$0xff]
      %v349 = vld [vmem:[#allocation2 + $0x18] sm:$0xff]
      %v350 = vld [vmem:[#allocation2 + $0x20] sm:$0xff]
      %v351 = vld [vmem:[#allocation2 + $0x28] sm:$0xff]
      %v352 = vld [vmem:[#allocation2 + $0x30] sm:$0xff]
      %v353 = vld [vmem:[#allocation2 + $0x38] sm:$0xff]
      %v354 = vld [vmem:[#allocation2 + $0x40] sm:$0xff]
      %v355 = vld [vmem:[#allocation2 + $0x48] sm:$0xff]
      %v356 = vld [vmem:[#allocation2 + $0x50] sm:$0xff]
      %v357 = vld [vmem:[#allocation2 + $0x58] sm:$0xff]
      %v358 = vld [vmem:[#allocation2 + $0x60] sm:$0xff]
      %v359 = vld [vmem:[#allocation2 + $0x68] sm:$0xff]
      %v360 = vld [vmem:[#allocation2 + $0x70] sm:$0xff]
      %v361 = vld [vmem:[#allocation2 + $0x78] sm:$0xff]
      %v362 = vpack.c.bf16 %v347, %v346
      %v363 = vpack.c.bf16 %v349, %v348
      %v364 = vpack.c.bf16 %v351, %v350
      %v365 = vpack.c.bf16 %v353, %v352
      %v366 = vpack.c.bf16 %v355, %v354
      %v367 = vpack.c.bf16 %v357, %v356
      %v368 = vpack.c.bf16 %v359, %v358
      %v369 = vpack.c.bf16 %v361, %v360
      %v378 = vunpack.c.l.b16 %v362
      %v379 = vunpack.c.h.b16 %v362
      %v380 = vunpack.c.l.b16 %v363
      %v381 = vunpack.c.h.b16 %v363
      %v382 = vunpack.c.l.b16 %v364
      %v383 = vunpack.c.h.b16 %v364
      %v384 = vunpack.c.l.b16 %v365
      %v385 = vunpack.c.h.b16 %v365
      %v386 = vunpack.c.l.b16 %v366
      %v387 = vunpack.c.h.b16 %v366
      %v388 = vunpack.c.l.b16 %v367
      %v389 = vunpack.c.h.b16 %v367
      %v390 = vunpack.c.l.b16 %v368
      %v391 = vunpack.c.h.b16 %v368
      %v392 = vunpack.c.l.b16 %v369
      %v393 = vunpack.c.h.b16 %v369
      %v394 = vpack.c.b16 %v378, %v378
      %v395 = vpack.c.b16 %v379, %v379
      %v396 = vpack.c.b16 %v380, %v380
      %v397 = vpack.c.b16 %v381, %v381
      %v398 = vpack.c.b16 %v382, %v382
      %v399 = vpack.c.b16 %v383, %v383
      %v400 = vpack.c.b16 %v384, %v384
      %v401 = vpack.c.b16 %v385, %v385
      %v402 = vpack.c.b16 %v386, %v386
      %v403 = vpack.c.b16 %v387, %v387
      %v404 = vpack.c.b16 %v388, %v388
      %v405 = vpack.c.b16 %v389, %v389
      %v406 = vpack.c.b16 %v390, %v390
      %v407 = vpack.c.b16 %v391, %v391
      %v408 = vpack.c.b16 %v392, %v392
      %v409 = vpack.c.b16 %v393, %v393
      %426 = vst [vmem:[#allocation8] sm:$0xf] %v394
      %427 = vst [vmem:[#allocation8 + $0x4] sm:$0xf] %v395
      %428 = vst [vmem:[#allocation8 + $0x8] sm:$0xf] %v396
      %429 = vst [vmem:[#allocation8 + $0xc] sm:$0xf] %v397
      %430 = vst [vmem:[#allocation8 + $0x10] sm:$0xf] %v398
      %431 = vst [vmem:[#allocation8 + $0x14] sm:$0xf] %v399
      %432 = vst [vmem:[#allocation8 + $0x18] sm:$0xf] %v400
      %433 = vst [vmem:[#allocation8 + $0x1c] sm:$0xf] %v401
      %434 = vst [vmem:[#allocation8 + $0x20] sm:$0xf] %v402
      %435 = vst [vmem:[#allocation8 + $0x24] sm:$0xf] %v403
      %436 = vst [vmem:[#allocation8 + $0x28] sm:$0xf] %v404
      %437 = vst [vmem:[#allocation8 + $0x2c] sm:$0xf] %v405
      %438 = vst [vmem:[#allocation8 + $0x30] sm:$0xf] %v406
      %439 = vst [vmem:[#allocation8 + $0x34] sm:$0xf] %v407
      %440 = vst [vmem:[#allocation8 + $0x38] sm:$0xf] %v408
      %441 = vst [vmem:[#allocation8 + $0x3c] sm:$0xf] %v409
      %v442 = vld [vmem:[%s2] sm:$0x1]
      %v444 = vlaneseq
      %v445 = vshrl.u32 %v444, 7
      %v446 = vsub.s32 0, %v445
      %v447 = vrot.slane %v442, %v446
      %v449 = vmul.f32 %v346, %v447
      %v450 = vmul.f32 %v347, %v447
      %v451 = vmul.f32 %v348, %v447
      %v452 = vmul.f32 %v349, %v447
      %v453 = vmul.f32 %v350, %v447
      %v454 = vmul.f32 %v351, %v447
      %v455 = vmul.f32 %v352, %v447
      %v456 = vmul.f32 %v353, %v447
      %v457 = vmul.f32 %v354, %v447
      %v458 = vmul.f32 %v355, %v447
      %v459 = vmul.f32 %v356, %v447
      %v460 = vmul.f32 %v357, %v447
      %v461 = vmul.f32 %v358, %v447
      %v462 = vmul.f32 %v359, %v447
      %v463 = vmul.f32 %v360, %v447
      %v464 = vmul.f32 %v361, %v447
      %465 = vadd.xlane.f32.xlu0 %v449
      %v466 = vpop.xlane.xlu0 %465
      %467 = vadd.xlane.f32.xlu0 %v450
      %v468 = vpop.xlane.xlu0 %467
      %469 = vadd.xlane.f32.xlu0 %v451
      %v470 = vpop.xlane.xlu0 %469
      %471 = vadd.xlane.f32.xlu0 %v452
      %v472 = vpop.xlane.xlu0 %471
      %473 = vadd.xlane.f32.xlu0 %v453
      %v474 = vpop.xlane.xlu0 %473
      %475 = vadd.xlane.f32.xlu0 %v454
      %v476 = vpop.xlane.xlu0 %475
      %477 = vadd.xlane.f32.xlu0 %v455
      %v478 = vpop.xlane.xlu0 %477
      %479 = vadd.xlane.f32.xlu0 %v456
      %v480 = vpop.xlane.xlu0 %479
      %481 = vadd.xlane.f32.xlu0 %v457
      %v482 = vpop.xlane.xlu0 %481
      %483 = vadd.xlane.f32.xlu0 %v458
      %v484 = vpop.xlane.xlu0 %483
      %485 = vadd.xlane.f32.xlu0 %v459
      %v486 = vpop.xlane.xlu0 %485
      %487 = vadd.xlane.f32.xlu0 %v460
      %v488 = vpop.xlane.xlu0 %487
      %489 = vadd.xlane.f32.xlu0 %v461
      %v490 = vpop.xlane.xlu0 %489
      %491 = vadd.xlane.f32.xlu0 %v462
      %v492 = vpop.xlane.xlu0 %491
      %493 = vadd.xlane.f32.xlu0 %v463
      %v494 = vpop.xlane.xlu0 %493
      %495 = vadd.xlane.f32.xlu0 %v464
      %v496 = vpop.xlane.xlu0 %495
      %vm497 = vcmask 7168
      %498 = vst.msk [vmem:[%s5] sm:$0xff] %vm497, %v466
      %499 = vst.msk [vmem:[%s5 + $0x8] sm:$0xff] %vm497, %v468
      %500 = vst.msk [vmem:[%s5 + $0x10] sm:$0xff] %vm497, %v470
      %501 = vst.msk [vmem:[%s5 + $0x18] sm:$0xff] %vm497, %v472
      %502 = vst.msk [vmem:[%s5 + $0x20] sm:$0xff] %vm497, %v474
      %503 = vst.msk [vmem:[%s5 + $0x28] sm:$0xff] %vm497, %v476
      %504 = vst.msk [vmem:[%s5 + $0x30] sm:$0xff] %vm497, %v478
      %505 = vst.msk [vmem:[%s5 + $0x38] sm:$0xff] %vm497, %v480
      %506 = vst.msk [vmem:[%s5 + $0x40] sm:$0xff] %vm497, %v482
      %507 = vst.msk [vmem:[%s5 + $0x48] sm:$0xff] %vm497, %v484
      %508 = vst.msk [vmem:[%s5 + $0x50] sm:$0xff] %vm497, %v486
      %509 = vst.msk [vmem:[%s5 + $0x58] sm:$0xff] %vm497, %v488
      %510 = vst.msk [vmem:[%s5 + $0x60] sm:$0xff] %vm497, %v490
      %511 = vst.msk [vmem:[%s5 + $0x68] sm:$0xff] %vm497, %v492
      %512 = vst.msk [vmem:[%s5 + $0x70] sm:$0xff] %vm497, %v494
      %513 = vst.msk [vmem:[%s5 + $0x78] sm:$0xff] %vm497, %v496
      %v514 = vld [vmem:[%s3] sm:$0x1]
      %v516 = vlaneseq
      %v517 = vshrl.u32 %v516, 7
      %v518 = vsub.s32 0, %v517
      %v519 = vrot.slane %v514, %v518
      %v521 = vmul.f32 %v346, %v519
      %v522 = vmul.f32 %v347, %v519
      %v523 = vmul.f32 %v348, %v519
      %v524 = vmul.f32 %v349, %v519
      %v525 = vmul.f32 %v350, %v519
      %v526 = vmul.f32 %v351, %v519
      %v527 = vmul.f32 %v352, %v519
      %v528 = vmul.f32 %v353, %v519
      %v529 = vmul.f32 %v354, %v519
      %v530 = vmul.f32 %v355, %v519
      %v531 = vmul.f32 %v356, %v519
      %v532 = vmul.f32 %v357, %v519
      %v533 = vmul.f32 %v358, %v519
      %v534 = vmul.f32 %v359, %v519
      %v535 = vmul.f32 %v360, %v519
      %v536 = vmul.f32 %v361, %v519
      %537 = vadd.xlane.f32.xlu0 %v521
      %v538 = vpop.xlane.xlu0 %537
      %539 = vadd.xlane.f32.xlu0 %v522
      %v540 = vpop.xlane.xlu0 %539
      %541 = vadd.xlane.f32.xlu0 %v523
      %v542 = vpop.xlane.xlu0 %541
      %543 = vadd.xlane.f32.xlu0 %v524
      %v544 = vpop.xlane.xlu0 %543
      %545 = vadd.xlane.f32.xlu0 %v525
      %v546 = vpop.xlane.xlu0 %545
      %547 = vadd.xlane.f32.xlu0 %v526
      %v548 = vpop.xlane.xlu0 %547
      %549 = vadd.xlane.f32.xlu0 %v527
      %v550 = vpop.xlane.xlu0 %549
      %551 = vadd.xlane.f32.xlu0 %v528
      %v552 = vpop.xlane.xlu0 %551
      %553 = vadd.xlane.f32.xlu0 %v529
      %v554 = vpop.xlane.xlu0 %553
      %555 = vadd.xlane.f32.xlu0 %v530
      %v556 = vpop.xlane.xlu0 %555
      %557 = vadd.xlane.f32.xlu0 %v531
      %v558 = vpop.xlane.xlu0 %557
      %559 = vadd.xlane.f32.xlu0 %v532
      %v560 = vpop.xlane.xlu0 %559
      %561 = vadd.xlane.f32.xlu0 %v533
      %v562 = vpop.xlane.xlu0 %561
      %563 = vadd.xlane.f32.xlu0 %v534
      %v564 = vpop.xlane.xlu0 %563
      %565 = vadd.xlane.f32.xlu0 %v535
      %v566 = vpop.xlane.xlu0 %565
      %567 = vadd.xlane.f32.xlu0 %v536
      %v568 = vpop.xlane.xlu0 %567
      %569 = vst.msk [vmem:[%s6] sm:$0xff] %vm497, %v538
      %570 = vst.msk [vmem:[%s6 + $0x8] sm:$0xff] %vm497, %v540
      %571 = vst.msk [vmem:[%s6 + $0x10] sm:$0xff] %vm497, %v542
      %572 = vst.msk [vmem:[%s6 + $0x18] sm:$0xff] %vm497, %v544
      %573 = vst.msk [vmem:[%s6 + $0x20] sm:$0xff] %vm497, %v546
      %574 = vst.msk [vmem:[%s6 + $0x28] sm:$0xff] %vm497, %v548
      %575 = vst.msk [vmem:[%s6 + $0x30] sm:$0xff] %vm497, %v550
      %576 = vst.msk [vmem:[%s6 + $0x38] sm:$0xff] %vm497, %v552
      %577 = vst.msk [vmem:[%s6 + $0x40] sm:$0xff] %vm497, %v554
      %578 = vst.msk [vmem:[%s6 + $0x48] sm:$0xff] %vm497, %v556
      %579 = vst.msk [vmem:[%s6 + $0x50] sm:$0xff] %vm497, %v558
      %580 = vst.msk [vmem:[%s6 + $0x58] sm:$0xff] %vm497, %v560
      %581 = vst.msk [vmem:[%s6 + $0x60] sm:$0xff] %vm497, %v562
      %582 = vst.msk [vmem:[%s6 + $0x68] sm:$0xff] %vm497, %v564
      %583 = vst.msk [vmem:[%s6 + $0x70] sm:$0xff] %vm497, %v566
      %584 = vst.msk [vmem:[%s6 + $0x78] sm:$0xff] %vm497, %v568
    $region33: #{tpu_custom_call.1} parent=1 // pred_fallthru
      _
    // Predicated region
    $region34: #{tpu_custom_call.1} parent=1 // pred_check
      _
    $region35: #{tpu_custom_call.1} parent=1 // pred_check_branch
      %586 = sbr.rel (0) target = $region37
    $region36: #{tpu_custom_call.1} parent=1 // pred_region
      %s588 = ssub.s32 1024, 1024
      %589 = vsyncadd [#allocation5], %s588
      %s590 = sshll.u32 [#allocation8], 4
      %s591 = int_to_ptr.vmem [resolvable:$true] %s590
      %596 = dma.vmem_to_hbm [thread:$0]  %s591, 1024, %s4, [#allocation5], 64, 64, 4
    $region37: #{tpu_custom_call.1} parent=1 // pred_fallthru
      _
    // Predicated region
    $region38: #{tpu_custom_call.1} parent=1 // pred_check
      _
    $region39: #{tpu_custom_call.1} parent=1 // pred_check_branch
      %598 = sbr.rel (0) target = $region41
    $region40: #{tpu_custom_call.1} parent=1 // pred_region
      _
    $region41: #{tpu_custom_call.1} parent=1 // pred_fallthru
      _
    // Predicated region
    $region42: #{tpu_custom_call.1} parent=1 // pred_check
      _
    $region43: #{tpu_custom_call.1} parent=1 // pred_check_branch
      %600 = sbr.rel (0) target = $region45
    $region44: #{tpu_custom_call.1} parent=1 // pred_region
      _
    $region45: #{tpu_custom_call.1} parent=1 // pred_fallthru
      _
    // Predicated region
    $region46: #{tpu_custom_call.1} parent=1 // pred_check
      _
    $region47: #{tpu_custom_call.1} parent=1 // pred_check_branch
      %602 = sbr.rel (0) target = $region49
    $region48: #{tpu_custom_call.1} parent=1 // pred_region
      %603 = dma.done [#allocation5], 1024
    $region49: #{tpu_custom_call.1} parent=1 // pred_fallthru
      _
    // Predicated region
    $region50: #{tpu_custom_call.1} parent=1 // pred_check
      _
    $region51: #{tpu_custom_call.1} parent=1 // pred_check_branch
      %605 = sbr.rel (0) target = $region53
    $region52: #{tpu_custom_call.1} parent=1 // pred_region
      _
    $region53: #{tpu_custom_call.1} parent=1 // pred_fallthru
      _
    // Predicated region
    $region54: #{tpu_custom_call.1} parent=1 // pred_check
      _
    $region55: #{tpu_custom_call.1} parent=1 // pred_check_branch
      %607 = sbr.rel (0) target = $region57
    $region56: #{tpu_custom_call.1} parent=1 // pred_region
      _
    $region57: #{tpu_custom_call.1} parent=1 // pred_fallthru
      _
    %608 = vsyncpa [#allocation4], 1
    %609 = vsyncpa [#allocation7], 1
    %610 = vsyncpa [#allocation5], 1

</llo_original>
